<compile_context>
chip_gen: v7x
topology: tpu7x:2x2x1
jax: 0.10.0
libtpu: 0.0.40
codegen_flags: <defaults>
</compile_context>

<pallas_src>
import functools
import math

import jax
import jax.numpy as jnp
from jax.experimental import pallas as pl
from jax.experimental.pallas import tpu as pltpu

HID = 200      # real hidden width
IN_F = 2       # real input features
OUT_F = 2      # real output features

HID_P = 256    # hidden padded to a lane multiple
OUT_P = 128    # output padded to a lane multiple (unmasked, lane-dense stores)
IN_SUB = 8     # w1 row padding (sublane multiple)


def _round_up(x, m):
    return ((x + m - 1) // m) * m


def _pad2d(a, rows, cols):
    r, c = a.shape
    return jnp.pad(a, ((0, rows - r), (0, cols - c)))


# ---------------------------------------------------------------------------
# Pallas kernel: fused 4-layer MLP forward for one batch tile.
# ---------------------------------------------------------------------------
def _actor_mlp_kernel(x_ref,
                      w1_ref, b1_ref,
                      w2_ref, b2_ref,
                      w3_ref, b3_ref,
                      w4_ref, b4_ref,
                      out_ref):
    x = x_ref[...].astype(jnp.float32)                 # (TB, 2)

    # ---- layer 1 on the VPU (only 2 live contraction columns) -------------
    h = (x[:, 0:1] * w1_ref[0:1, :]
         + x[:, 1:2] * w1_ref[1:2, :]
         + b1_ref[...])                                # (TB, HID_P) f32
    h = jnp.maximum(h, 0.0)

    # ---- layer 2 (MXU, bf16 operands, f32 accumulation) --------------------
    h = jnp.dot(h.astype(jnp.bfloat16), w2_ref[...],
                preferred_element_type=jnp.float32) + b2_ref[...]
    h = jnp.maximum(h, 0.0)

    # ---- layer 3 (MXU) ------------------------------------------------------
    h = jnp.dot(h.astype(jnp.bfloat16), w3_ref[...],
                preferred_element_type=jnp.float32) + b3_ref[...]
    h = jnp.maximum(h, 0.0)

    # ---- output layer (MXU, no activation) ----------------------------------
    y = jnp.dot(h.astype(jnp.bfloat16), w4_ref[...],
                preferred_element_type=jnp.float32) + b4_ref[...]
    out_ref[...] = y.astype(out_ref.dtype)


# ---------------------------------------------------------------------------
# Parameter init (matches PyTorch kaiming_uniform_ fan_in / relu, bias = 0).
# Weights are (in_features, out_features) so the kernel computes y = x @ W + b.
# ---------------------------------------------------------------------------
def init_params(key):
    dims = [(IN_F, HID), (HID, HID), (HID, HID), (HID, OUT_F)]
    params = []
    for fan_in, fan_out in dims:
        key, sub = jax.random.split(key)
        bound = math.sqrt(6.0 / fan_in)  # gain=sqrt(2), bound = gain*sqrt(3/fan_in)
        w = jax.random.uniform(sub, (fan_in, fan_out), jnp.float32,
                               minval=-bound, maxval=bound)
        b = jnp.zeros((fan_out,), jnp.float32)
        params.append((w, b))
    return params


def prepare_params(params):
    """Pad + cast once at init time (hoisted out of the per-call path)."""
    (w1, b1), (w2, b2), (w3, b3), (w4, b4) = params
    return (
        _pad2d(w1.astype(jnp.float32), IN_SUB, HID_P),    # layer 1 stays f32 (VPU)
        _pad2d(b1[None, :].astype(jnp.float32), 1, HID_P),
        _pad2d(w2.astype(jnp.bfloat16), HID_P, HID_P),
        _pad2d(b2[None, :].astype(jnp.float32), 1, HID_P),
        _pad2d(w3.astype(jnp.bfloat16), HID_P, HID_P),
        _pad2d(b3[None, :].astype(jnp.float32), 1, HID_P),
        _pad2d(w4.astype(jnp.bfloat16), HID_P, OUT_P),
        _pad2d(b4[None, :].astype(jnp.float32), 1, OUT_P),
    )


# ---------------------------------------------------------------------------
# Wrapper: batch-tiled pallas_call with resident weights.
# ---------------------------------------------------------------------------
@functools.partial(jax.jit, static_argnames=("block_batch",))
def residual_actor_forward(x, prepared, *, block_batch=256):
    w1_p, b1_p, w2_p, b2_p, w3_p, b3_p, w4_p, b4_p = prepared
    B = x.shape[0]

    # Batch tile: multiple of 16 (bf16 sublane tile), capped at block_batch.
    TB = min(_round_up(block_batch, 16), _round_up(max(B, 1), 16))
    B_P = _round_up(B, TB)
    nb = B_P // TB

    x_p = jnp.pad(x.astype(jnp.float32), ((0, B_P - B), (0, 0)))

    # Weights/biases use constant block indices -> fetched once, VMEM-resident.
    res = lambda shape: pl.BlockSpec(shape, lambda i: (0,) * len(shape))

    flops = 2 * B_P * (IN_F * HID + HID * HID + HID * HID + HID * OUT_F)
    bytes_accessed = (
        x_p.size * 4 + B_P * OUT_P * 4
        + w1_p.size * 4 + w2_p.size * 2 + w3_p.size * 2 + w4_p.size * 2
        + (b1_p.size + b2_p.size + b3_p.size + b4_p.size) * 4)

    out_p = pl.pallas_call(
        _actor_mlp_kernel,
        out_shape=jax.ShapeDtypeStruct((B_P, OUT_P), jnp.float32),
        grid=(nb,),
        in_specs=[
            pl.BlockSpec((TB, IN_F), lambda i: (i, 0)),   # streamed activations
            res((IN_SUB, HID_P)), res((1, HID_P)),
            res((HID_P, HID_P)), res((1, HID_P)),
            res((HID_P, HID_P)), res((1, HID_P)),
            res((HID_P, OUT_P)), res((1, OUT_P)),
        ],
        out_specs=pl.BlockSpec((TB, OUT_P), lambda i: (i, 0)),
        compiler_params=pltpu.CompilerParams(
            dimension_semantics=("parallel",)),
        cost_estimate=pl.CostEstimate(
            flops=flops, transcendentals=0, bytes_accessed=bytes_accessed),
    )(x_p, w1_p, b1_p, w2_p, b2_p, w3_p, b3_p, w4_p, b4_p)

    return out_p[:B, :OUT_F]


# ---------------------------------------------------------------------------
# References.
# ---------------------------------------------------------------------------
def reference_forward(x, params):
    """Pure f32 reference (semantics of the PyTorch module)."""
    (w1, b1), (w2, b2), (w3, b3), (w4, b4) = params
    h = jax.nn.relu(x @ w1 + b1)
    h = jax.nn.relu(h @ w2 + b2)
    h = jax.nn.relu(h @ w3 + b3)
    return h @ w4 + b4


def reference_forward_mixed(x, params):
    """Mirrors the kernel's mixed precision (bf16 matmul operands, f32 accum)."""
    (w1, b1), (w2, b2), (w3, b3), (w4, b4) = params
    h = jax.nn.relu(x @ w1 + b1)
    h = jax.nn.relu(jnp.dot(h.astype(jnp.bfloat16), w2.astype(jnp.bfloat16),
                            preferred_element_type=jnp.float32) + b2)
    h = jax.nn.relu(jnp.dot(h.astype(jnp.bfloat16), w3.astype(jnp.bfloat16),
                            preferred_element_type=jnp.float32) + b3)
    return jnp.dot(h.astype(jnp.bfloat16), w4.astype(jnp.bfloat16),
                   preferred_element_type=jnp.float32) + b4


if __name__ == "__main__":
    key = jax.random.PRNGKey(0)
    key, pkey, xkey = jax.random.split(key, 3)

    params = init_params(pkey)
    prepared = prepare_params(params)

    B = 40                                   # small batch; exercises padding + grid
    x = jax.random.normal(xkey, (B, IN_F), jnp.float32)

    # small batch tile -> 3 grid steps (tests streaming + resident weights)
    out = residual_actor_forward(x, prepared, block_batch=16)
    out = jax.block_until_ready(out)
    assert out.shape == (B, OUT_F), out.shape

    ref_mixed = reference_forward_mixed(x, params)
    ref_f32 = reference_forward(x, params)

    err_mixed = float(jnp.max(jnp.abs(out - ref_mixed)))
    err_f32 = float(jnp.max(jnp.abs(out - ref_f32)))
    assert jnp.allclose(out, ref_mixed, atol=1e-2, rtol=1e-2), \
        f"mixed-precision mismatch: max abs err = {err_mixed}"
    assert jnp.allclose(out, ref_f32, atol=0.15, rtol=0.05), \
        f"f32 reference mismatch: max abs err = {err_f32}"

    # default path: one big batch block
    out2 = jax.block_until_ready(residual_actor_forward(x, prepared))
    assert jnp.allclose(out2, out, atol=1e-2, rtol=1e-2)

    print("KERNEL_OK")
</pallas_src>

<mosaic_0001>
module attributes {stable_mosaic.version = 11 : i64} {
  func.func @_actor_mlp_kernel(%arg0: i32, %arg1: memref<16x2xf32, #tpu.memory_space<vmem>>, %arg2: memref<8x256xf32, #tpu.memory_space<vmem>>, %arg3: memref<1x256xf32, #tpu.memory_space<vmem>>, %arg4: memref<256x256xbf16, #tpu.memory_space<vmem>>, %arg5: memref<1x256xf32, #tpu.memory_space<vmem>>, %arg6: memref<256x256xbf16, #tpu.memory_space<vmem>>, %arg7: memref<1x256xf32, #tpu.memory_space<vmem>>, %arg8: memref<256x128xbf16, #tpu.memory_space<vmem>>, %arg9: memref<1x128xf32, #tpu.memory_space<vmem>>, %arg10: memref<16x128xf32, #tpu.memory_space<vmem>>) attributes {dimension_semantics = [#tpu.dimension_semantics<parallel>], iteration_bounds = array<i64: 3>, scalar_prefetch = 0 : i64, scratch_operands = 0 : i64, tpu.core_type = #tpu.core_type<tc>, window_params = [{transform_indices = @transform_0, window_bounds = array<i64: 16, 2>}, {pipeline_mode = #tpu.pipeline_mode<synchronous>, transform_indices = @transform_1, window_bounds = array<i64: 8, 256>}, {pipeline_mode = #tpu.pipeline_mode<synchronous>, transform_indices = @transform_2, window_bounds = array<i64: 1, 256>}, {pipeline_mode = #tpu.pipeline_mode<synchronous>, transform_indices = @transform_3, window_bounds = array<i64: 256, 256>}, {pipeline_mode = #tpu.pipeline_mode<synchronous>, transform_indices = @transform_4, window_bounds = array<i64: 1, 256>}, {pipeline_mode = #tpu.pipeline_mode<synchronous>, transform_indices = @transform_5, window_bounds = array<i64: 256, 256>}, {pipeline_mode = #tpu.pipeline_mode<synchronous>, transform_indices = @transform_6, window_bounds = array<i64: 1, 256>}, {pipeline_mode = #tpu.pipeline_mode<synchronous>, transform_indices = @transform_7, window_bounds = array<i64: 256, 128>}, {pipeline_mode = #tpu.pipeline_mode<synchronous>, transform_indices = @transform_8, window_bounds = array<i64: 1, 128>}, {transform_indices = @transform_9, window_bounds = array<i64: 16, 128>}]} {
    %c0 = arith.constant 0 : index
    %c0_0 = arith.constant 0 : index
    %0 = vector.load %arg1[%c0, %c0_0] : memref<16x2xf32, #tpu.memory_space<vmem>>, vector<16x2xf32>
    %1 = vector.extract_strided_slice %0 {offsets = [0, 0], sizes = [16, 1], strides = [1, 1]} : vector<16x2xf32> to vector<16x1xf32>
    %c0_1 = arith.constant 0 : index
    %c0_2 = arith.constant 0 : index
    %2 = vector.load %arg2[%c0_1, %c0_2] : memref<8x256xf32, #tpu.memory_space<vmem>>, vector<1x256xf32>
    %3 = vector.broadcast %1 : vector<16x1xf32> to vector<16x256xf32>
    %4 = vector.broadcast %2 : vector<1x256xf32> to vector<16x256xf32>
    %5 = arith.mulf %3, %4 : vector<16x256xf32>
    %6 = vector.extract_strided_slice %0 {offsets = [0, 1], sizes = [16, 1], strides = [1, 1]} : vector<16x2xf32> to vector<16x1xf32>
    %c1 = arith.constant 1 : index
    %c0_3 = arith.constant 0 : index
    %7 = vector.load %arg2[%c1, %c0_3] : memref<8x256xf32, #tpu.memory_space<vmem>>, vector<1x256xf32>
    %8 = vector.broadcast %6 : vector<16x1xf32> to vector<16x256xf32>
    %9 = vector.broadcast %7 : vector<1x256xf32> to vector<16x256xf32>
    %10 = arith.mulf %8, %9 : vector<16x256xf32>
    %11 = arith.addf %5, %10 : vector<16x256xf32>
    %c0_4 = arith.constant 0 : index
    %c0_5 = arith.constant 0 : index
    %12 = vector.load %arg3[%c0_4, %c0_5] : memref<1x256xf32, #tpu.memory_space<vmem>>, vector<1x256xf32>
    %13 = vector.broadcast %12 : vector<1x256xf32> to vector<16x256xf32>
    %14 = arith.addf %11, %13 : vector<16x256xf32>
    %cst = arith.constant 0.000000e+00 : f32
    %15 = vector.broadcast %cst : f32 to vector<16x256xf32>
    %16 = arith.maximumf %14, %15 : vector<16x256xf32>
    %17 = arith.truncf %16 : vector<16x256xf32> to vector<16x256xbf16>
    %c0_6 = arith.constant 0 : index
    %c0_7 = arith.constant 0 : index
    %18 = vector.load %arg4[%c0_6, %c0_7] : memref<256x256xbf16, #tpu.memory_space<vmem>>, vector<256x256xbf16>
    %cst_8 = arith.constant dense<0.000000e+00> : vector<16x256xf32>
    %19 = tpu.matmul %17, %18, %cst_8 {dimension_numbers = #tpu.dot_dimension_numbers<[1], [0], [0], [1], [0, 0, 1, 1], [], []>} : vector<16x256xbf16>, vector<256x256xbf16>, vector<16x256xf32> -> vector<16x256xf32>
    %c0_9 = arith.constant 0 : index
    %c0_10 = arith.constant 0 : index
    %20 = vector.load %arg5[%c0_9, %c0_10] : memref<1x256xf32, #tpu.memory_space<vmem>>, vector<1x256xf32>
    %21 = vector.broadcast %20 : vector<1x256xf32> to vector<16x256xf32>
    %22 = arith.addf %19, %21 : vector<16x256xf32>
    %cst_11 = arith.constant 0.000000e+00 : f32
    %23 = vector.broadcast %cst_11 : f32 to vector<16x256xf32>
    %24 = arith.maximumf %22, %23 : vector<16x256xf32>
    %25 = arith.truncf %24 : vector<16x256xf32> to vector<16x256xbf16>
    %c0_12 = arith.constant 0 : index
    %c0_13 = arith.constant 0 : index
    %26 = vector.load %arg6[%c0_12, %c0_13] : memref<256x256xbf16, #tpu.memory_space<vmem>>, vector<256x256xbf16>
    %cst_14 = arith.constant dense<0.000000e+00> : vector<16x256xf32>
    %27 = tpu.matmul %25, %26, %cst_14 {dimension_numbers = #tpu.dot_dimension_numbers<[1], [0], [0], [1], [0, 0, 1, 1], [], []>} : vector<16x256xbf16>, vector<256x256xbf16>, vector<16x256xf32> -> vector<16x256xf32>
    %c0_15 = arith.constant 0 : index
    %c0_16 = arith.constant 0 : index
    %28 = vector.load %arg7[%c0_15, %c0_16] : memref<1x256xf32, #tpu.memory_space<vmem>>, vector<1x256xf32>
    %29 = vector.broadcast %28 : vector<1x256xf32> to vector<16x256xf32>
    %30 = arith.addf %27, %29 : vector<16x256xf32>
    %cst_17 = arith.constant 0.000000e+00 : f32
    %31 = vector.broadcast %cst_17 : f32 to vector<16x256xf32>
    %32 = arith.maximumf %30, %31 : vector<16x256xf32>
    %33 = arith.truncf %32 : vector<16x256xf32> to vector<16x256xbf16>
    %c0_18 = arith.constant 0 : index
    %c0_19 = arith.constant 0 : index
    %34 = vector.load %arg8[%c0_18, %c0_19] : memref<256x128xbf16, #tpu.memory_space<vmem>>, vector<256x128xbf16>
    %cst_20 = arith.constant dense<0.000000e+00> : vector<16x128xf32>
    %35 = tpu.matmul %33, %34, %cst_20 {dimension_numbers = #tpu.dot_dimension_numbers<[1], [0], [0], [1], [0, 0, 1, 1], [], []>} : vector<16x256xbf16>, vector<256x128xbf16>, vector<16x128xf32> -> vector<16x128xf32>
    %c0_21 = arith.constant 0 : index
    %c0_22 = arith.constant 0 : index
    %36 = vector.load %arg9[%c0_21, %c0_22] : memref<1x128xf32, #tpu.memory_space<vmem>>, vector<1x128xf32>
    %37 = vector.broadcast %36 : vector<1x128xf32> to vector<16x128xf32>
    %38 = arith.addf %35, %37 : vector<16x128xf32>
    %c0_23 = arith.constant 0 : index
    %c0_24 = arith.constant 0 : index
    %39 = vector.load %arg10[%c0_23, %c0_24] : memref<16x128xf32, #tpu.memory_space<vmem>>, vector<16x128xf32>
    tpu.vector_store %arg10[%c0_23, %c0_24], %38 {strides = array<i32>} : memref<16x128xf32, #tpu.memory_space<vmem>>, vector<16x128xf32>,
    return
  }
  func.func @transform_0(%arg0: i32) -> (i32, i32) {
    %c0_i32 = arith.constant 0 : i32
    %c0_i32_0 = arith.constant 0 : i32
    return %arg0, %c0_i32 : i32, i32
  }
  func.func @transform_1(%arg0: i32) -> (i32, i32) {
    %c0_i32 = arith.constant 0 : i32
    %c0_i32_0 = arith.constant 0 : i32
    %c0_i32_1 = arith.constant 0 : i32
    return %c0_i32, %c0_i32_0 : i32, i32
  }
  func.func @transform_2(%arg0: i32) -> (i32, i32) {
    %c0_i32 = arith.constant 0 : i32
    %c0_i32_0 = arith.constant 0 : i32
    %c0_i32_1 = arith.constant 0 : i32
    return %c0_i32, %c0_i32_0 : i32, i32
  }
  func.func @transform_3(%arg0: i32) -> (i32, i32) {
    %c0_i32 = arith.constant 0 : i32
    %c0_i32_0 = arith.constant 0 : i32
    %c0_i32_1 = arith.constant 0 : i32
    return %c0_i32, %c0_i32_0 : i32, i32
  }
  func.func @transform_4(%arg0: i32) -> (i32, i32) {
    %c0_i32 = arith.constant 0 : i32
    %c0_i32_0 = arith.constant 0 : i32
    %c0_i32_1 = arith.constant 0 : i32
    return %c0_i32, %c0_i32_0 : i32, i32
  }
  func.func @transform_5(%arg0: i32) -> (i32, i32) {
    %c0_i32 = arith.constant 0 : i32
    %c0_i32_0 = arith.constant 0 : i32
    %c0_i32_1 = arith.constant 0 : i32
    return %c0_i32, %c0_i32_0 : i32, i32
  }
  func.func @transform_6(%arg0: i32) -> (i32, i32) {
    %c0_i32 = arith.constant 0 : i32
    %c0_i32_0 = arith.constant 0 : i32
    %c0_i32_1 = arith.constant 0 : i32
    return %c0_i32, %c0_i32_0 : i32, i32
  }
  func.func @transform_7(%arg0: i32) -> (i32, i32) {
    %c0_i32 = arith.constant 0 : i32
    %c0_i32_0 = arith.constant 0 : i32
    %c0_i32_1 = arith.constant 0 : i32
    return %c0_i32, %c0_i32_0 : i32, i32
  }
  func.func @transform_8(%arg0: i32) -> (i32, i32) {
    %c0_i32 = arith.constant 0 : i32
    %c0_i32_0 = arith.constant 0 : i32
    %c0_i32_1 = arith.constant 0 : i32
    return %c0_i32, %c0_i32_0 : i32, i32
  }
  func.func @transform_9(%arg0: i32) -> (i32, i32) {
    %c0_i32 = arith.constant 0 : i32
    %c0_i32_0 = arith.constant 0 : i32
    return %arg0, %c0_i32 : i32, i32
  }
}

</mosaic_0001>

<llo_original>
// kernel: residual_actor_forward.1
$region0: #{residual_actor_forward.1}
  #allocation0 [shape = 'u32[]', space=smem, size = 0x4, offset = 0x4, fixed_abs, tag = 'smem constant byte address 0x4 - core index']
  #allocation1 [shape = 'u32[144,128]{1,0:T(1,128)}', space=vmem, size = 0x12000, scoped, tag = 'internal scratch']
  %s0 = inlined_call_operand.vmem [shape: f32[48,2], index: 0, kind: input, shape index: {}]
  %s1 = inlined_call_operand.vmem [shape: f32[8,256], index: 1, kind: input, shape index: {}]
  %s2 = inlined_call_operand.vmem [shape: f32[1,256], index: 2, kind: input, shape index: {}]
  %s3 = inlined_call_operand.hbm [shape: bf16[256,256], index: 3, kind: input, shape index: {}]
  %s4 = inlined_call_operand.vmem [shape: f32[1,256], index: 4, kind: input, shape index: {}]
  %s5 = inlined_call_operand.hbm [shape: bf16[256,256], index: 5, kind: input, shape index: {}]
  %s6 = inlined_call_operand.vmem [shape: f32[1,256], index: 6, kind: input, shape index: {}]
  %s7 = inlined_call_operand.vmem [shape: bf16[256,128], index: 7, kind: input, shape index: {}]
  %s8 = inlined_call_operand.vmem [shape: f32[1,128], index: 8, kind: input, shape index: {}]
  %s9 = inlined_call_operand.vmem [shape: f32[48,128], index: 9, kind: output, shape index: {}]
  %s10 = sld [smem:[#allocation0]]
  $region77: #{residual_actor_forward.1} parent=0
    _
  %s12 = ssub.s32 1, %s10
  %s13 = scalar_select 0, %s12, %s10
  $region1: #{residual_actor_forward.1} parent=0
    #allocation2 [shape = 'u8[131072]{0}', space=vmem, size = 0x20000, scoped, tag = 'input window, operand 3, single buffered']
    #allocation3 [shape = 's32[2]{0}', space=sflag, size = 0x8, scoped, tag = 'scoped memory for residual_actor_forward.1']
    #allocation4 [shape = 'u8[131072]{0}', space=vmem, size = 0x20000, scoped, tag = 'input window, operand 5, single buffered']
    #allocation5 [shape = 's32[1]{0}', space=sflag, size = 0x4, scoped, tag = 'scoped memory for residual_actor_forward.1']
    %14 = vsyncpa [#allocation3], 0
    %15 = vsyncpa [#allocation5], 0
    loop: start=0, step=1, limit=5
    $region2: #{residual_actor_forward.1} parent=1 // loop_pre_header
      _
    $region3: #{residual_actor_forward.1} parent=1 // loop_header
      %s17 = sphi 0, %s21
      %p18 = scmp.ge.s32.totalorder %s17, 5
      %s27 = sphi 0, %s29
      %s30 = sphi 0, %s27
      %s31 = sphi 0, %s30
      %s47 = sphi 0, %s31
      %s51 = sphi 0, %s51
      %s53 = sphi 0, %s51
      %s54 = sphi 0, %s53
      %s68 = sphi 0, %s54
      %s72 = sphi 0, %s72
      %s74 = sphi 0, %s72
      %s75 = sphi 0, %s74
      %s89 = sphi 0, %s75
      %s93 = sphi 0, %s93
      %s95 = sphi 0, %s93
      %s96 = sphi 0, %s95
      %s110 = sphi 0, %s96
      %s114 = sphi 0, %s114
      %s116 = sphi 0, %s114
      %s117 = sphi 0, %s116
      %s131 = sphi 0, %s117
      %s135 = sphi 0, %s135
      %s137 = sphi 0, %s135
      %s138 = sphi 0, %s137
      %s152 = sphi 0, %s138
      %s156 = sphi 0, %s156
      %s158 = sphi 0, %s156
      %s159 = sphi 0, %s158
      %s173 = sphi 0, %s159
      %s177 = sphi 0, %s177
      %s179 = sphi 0, %s177
      %s180 = sphi 0, %s179
      %s194 = sphi 0, %s180
      %s198 = sphi 0, %s198
      %s200 = sphi 0, %s198
      %s201 = sphi 0, %s200
      %s215 = sphi 0, %s201
      %s221 = sphi 0, %s223
      %s224 = sphi 0, %s221
      %s225 = sphi 0, %s224
      %s241 = sphi 0, %s225
    $region4: #{residual_actor_forward.1} parent=1 // loop_header_branch
      %20 = sbr.rel (%p18) target = $region8
    $region5: #{residual_actor_forward.1} parent=1 // loop_body
      %s22 = ssub.s32 %s17, 1
      %s23 = ssub.s32 %s17, 2
      %s24 = sadd.s32 %s17, 1
      %s25 = ssub.s32 %s17, %s24
      %p26 = scmp.eq.s32.totalorder %s25, 0
      %s28 = sadd.s32 %s27, 1
      %s29 = scalar_select %p26, %s27, %s28
      %p32 = pneg %p26
      %p33 = scmp.eq.s32.totalorder %s17, 2
      %p34 = por %p32, %p33
      %p35 = scmp.ne.s32.totalorder %s27, %s30
      %p36 = scmp.eq.s32.totalorder %s17, 0
      %p37 = por %p35, %p36
      %p38 = scmp.ne.s32.totalorder %s27, %s30
      %p39 = scmp.eq.s32.totalorder %s22, 2
      %p40 = por %p38, %p39
      %p41 = scmp.ne.s32.totalorder %s30, %s31
      %p42 = scmp.eq.s32.totalorder %s22, 0
      %p43 = por %p41, %p42
      %p44 = scmp.ne.s32.totalorder %s30, %s31
      %p45 = scmp.eq.s32.totalorder %s23, 2
      %p46 = por %p44, %p45
      %p48 = scmp.ne.s32.totalorder %s31, %s47
      %p49 = scmp.eq.s32.totalorder %s23, 0
      %p50 = por %p48, %p49
      %s52 = sadd.s32 %s51, 1
      %p55 = scmp.eq.s32.totalorder %s17, 2
      %p56 = scmp.ne.s32.totalorder %s51, %s53
      %p57 = scmp.eq.s32.totalorder %s17, 0
      %p58 = por %p56, %p57
      %p59 = scmp.ne.s32.totalorder %s51, %s53
      %p60 = scmp.eq.s32.totalorder %s22, 2
      %p61 = por %p59, %p60
      %p62 = scmp.ne.s32.totalorder %s53, %s54
      %p63 = scmp.eq.s32.totalorder %s22, 0
      %p64 = por %p62, %p63
      %p65 = scmp.ne.s32.totalorder %s53, %s54
      %p66 = scmp.eq.s32.totalorder %s23, 2
      %p67 = por %p65, %p66
      %p69 = scmp.ne.s32.totalorder %s54, %s68
      %p70 = scmp.eq.s32.totalorder %s23, 0
      %p71 = por %p69, %p70
      %s73 = sadd.s32 %s72, 1
      %p76 = scmp.eq.s32.totalorder %s17, 2
      %p77 = scmp.ne.s32.totalorder %s72, %s74
      %p78 = scmp.eq.s32.totalorder %s17, 0
      %p79 = por %p77, %p78
      %p80 = scmp.ne.s32.totalorder %s72, %s74
      %p81 = scmp.eq.s32.totalorder %s22, 2
      %p82 = por %p80, %p81
      %p83 = scmp.ne.s32.totalorder %s74, %s75
      %p84 = scmp.eq.s32.totalorder %s22, 0
      %p85 = por %p83, %p84
      %p86 = scmp.ne.s32.totalorder %s74, %s75
      %p87 = scmp.eq.s32.totalorder %s23, 2
      %p88 = por %p86, %p87
      %p90 = scmp.ne.s32.totalorder %s75, %s89
      %p91 = scmp.eq.s32.totalorder %s23, 0
      %p92 = por %p90, %p91
      %s94 = sadd.s32 %s93, 1
      %p97 = scmp.eq.s32.totalorder %s17, 2
      %p98 = scmp.ne.s32.totalorder %s93, %s95
      %p99 = scmp.eq.s32.totalorder %s17, 0
      %p100 = por %p98, %p99
      %p101 = scmp.ne.s32.totalorder %s93, %s95
      %p102 = scmp.eq.s32.totalorder %s22, 2
      %p103 = por %p101, %p102
      %p104 = scmp.ne.s32.totalorder %s95, %s96
      %p105 = scmp.eq.s32.totalorder %s22, 0
      %p106 = por %p104, %p105
      %p107 = scmp.ne.s32.totalorder %s95, %s96
      %p108 = scmp.eq.s32.totalorder %s23, 2
      %p109 = por %p107, %p108
      %p111 = scmp.ne.s32.totalorder %s96, %s110
      %p112 = scmp.eq.s32.totalorder %s23, 0
      %p113 = por %p111, %p112
      %s115 = sadd.s32 %s114, 1
      %p118 = scmp.eq.s32.totalorder %s17, 2
      %p119 = scmp.ne.s32.totalorder %s114, %s116
      %p120 = scmp.eq.s32.totalorder %s17, 0
      %p121 = por %p119, %p120
      %p122 = scmp.ne.s32.totalorder %s114, %s116
      %p123 = scmp.eq.s32.totalorder %s22, 2
      %p124 = por %p122, %p123
      %p125 = scmp.ne.s32.totalorder %s116, %s117
      %p126 = scmp.eq.s32.totalorder %s22, 0
      %p127 = por %p125, %p126
      %p128 = scmp.ne.s32.totalorder %s116, %s117
      %p129 = scmp.eq.s32.totalorder %s23, 2
      %p130 = por %p128, %p129
      %p132 = scmp.ne.s32.totalorder %s117, %s131
      %p133 = scmp.eq.s32.totalorder %s23, 0
      %p134 = por %p132, %p133
      %s136 = sadd.s32 %s135, 1
      %p139 = scmp.eq.s32.totalorder %s17, 2
      %p140 = scmp.ne.s32.totalorder %s135, %s137
      %p141 = scmp.eq.s32.totalorder %s17, 0
      %p142 = por %p140, %p141
      %p143 = scmp.ne.s32.totalorder %s135, %s137
      %p144 = scmp.eq.s32.totalorder %s22, 2
      %p145 = por %p143, %p144
      %p146 = scmp.ne.s32.totalorder %s137, %s138
      %p147 = scmp.eq.s32.totalorder %s22, 0
      %p148 = por %p146, %p147
      %p149 = scmp.ne.s32.totalorder %s137, %s138
      %p150 = scmp.eq.s32.totalorder %s23, 2
      %p151 = por %p149, %p150
      %p153 = scmp.ne.s32.totalorder %s138, %s152
      %p154 = scmp.eq.s32.totalorder %s23, 0
      %p155 = por %p153, %p154
      %s157 = sadd.s32 %s156, 1
      %p160 = scmp.eq.s32.totalorder %s17, 2
      %p161 = scmp.ne.s32.totalorder %s156, %s158
      %p162 = scmp.eq.s32.totalorder %s17, 0
      %p163 = por %p161, %p162
      %p164 = scmp.ne.s32.totalorder %s156, %s158
      %p165 = scmp.eq.s32.totalorder %s22, 2
      %p166 = por %p164, %p165
      %p167 = scmp.ne.s32.totalorder %s158, %s159
      %p168 = scmp.eq.s32.totalorder %s22, 0
      %p169 = por %p167, %p168
      %p170 = scmp.ne.s32.totalorder %s158, %s159
      %p171 = scmp.eq.s32.totalorder %s23, 2
      %p172 = por %p170, %p171
      %p174 = scmp.ne.s32.totalorder %s159, %s173
      %p175 = scmp.eq.s32.totalorder %s23, 0
      %p176 = por %p174, %p175
      %s178 = sadd.s32 %s177, 1
      %p181 = scmp.eq.s32.totalorder %s17, 2
      %p182 = scmp.ne.s32.totalorder %s177, %s179
      %p183 = scmp.eq.s32.totalorder %s17, 0
      %p184 = por %p182, %p183
      %p185 = scmp.ne.s32.totalorder %s177, %s179
      %p186 = scmp.eq.s32.totalorder %s22, 2
      %p187 = por %p185, %p186
      %p188 = scmp.ne.s32.totalorder %s179, %s180
      %p189 = scmp.eq.s32.totalorder %s22, 0
      %p190 = por %p188, %p189
      %p191 = scmp.ne.s32.totalorder %s179, %s180
      %p192 = scmp.eq.s32.totalorder %s23, 2
      %p193 = por %p191, %p192
      %p195 = scmp.ne.s32.totalorder %s180, %s194
      %p196 = scmp.eq.s32.totalorder %s23, 0
      %p197 = por %p195, %p196
      %s199 = sadd.s32 %s198, 1
      %p202 = scmp.eq.s32.totalorder %s17, 2
      %p203 = scmp.ne.s32.totalorder %s198, %s200
      %p204 = scmp.eq.s32.totalorder %s17, 0
      %p205 = por %p203, %p204
      %p206 = scmp.ne.s32.totalorder %s198, %s200
      %p207 = scmp.eq.s32.totalorder %s22, 2
      %p208 = por %p206, %p207
      %p209 = scmp.ne.s32.totalorder %s200, %s201
      %p210 = scmp.eq.s32.totalorder %s22, 0
      %p211 = por %p209, %p210
      %p212 = scmp.ne.s32.totalorder %s200, %s201
      %p213 = scmp.eq.s32.totalorder %s23, 2
      %p214 = por %p212, %p213
      %p216 = scmp.ne.s32.totalorder %s201, %s215
      %p217 = scmp.eq.s32.totalorder %s23, 0
      %p218 = por %p216, %p217
      %s219 = ssub.s32 %s17, %s24
      %p220 = scmp.eq.s32.totalorder %s219, 0
      %s222 = sadd.s32 %s221, 1
      %s223 = scalar_select %p220, %s221, %s222
      %p226 = pneg %p220
      %p227 = scmp.eq.s32.totalorder %s17, 2
      %p228 = por %p226, %p227
      %p229 = scmp.ne.s32.totalorder %s221, %s224
      %p230 = scmp.eq.s32.totalorder %s17, 0
      %p231 = por %p229, %p230
      %p232 = scmp.ne.s32.totalorder %s221, %s224
      %p233 = scmp.eq.s32.totalorder %s22, 2
      %p234 = por %p232, %p233
      %p235 = scmp.ne.s32.totalorder %s224, %s225
      %p236 = scmp.eq.s32.totalorder %s22, 0
      %p237 = por %p235, %p236
      %p238 = scmp.ne.s32.totalorder %s224, %s225
      %p239 = scmp.eq.s32.totalorder %s23, 2
      %p240 = por %p238, %p239
      %p242 = scmp.ne.s32.totalorder %s225, %s241
      %p243 = scmp.eq.s32.totalorder %s23, 0
      %p244 = por %p242, %p243
      %p245 = scmp.le.s32.totalorder 1, %s17
      %p246 = scmp.lt.s32.totalorder %s17, 4
      %p247 = pnand %p245, %p246
      %p248 = pneg %p247
      // Predicated region
      $region9: #{residual_actor_forward.1} parent=5 // pred_check
        _
      $region10: #{residual_actor_forward.1} parent=5 // pred_check_branch
        %250 = sbr.rel (%p247) target = $region12
      $region11: #{residual_actor_forward.1} parent=5 // pred_region
        %s251 = ssub.s32 %s17, 1
        // Predicated region
        $region13: #{residual_actor_forward.1} parent=11 // pred_check
          %p252 = pneg %p64
        $region14: #{residual_actor_forward.1} parent=11 // pred_check_branch
          %254 = sbr.rel (%p252) target = $region16
        $region15: #{residual_actor_forward.1} parent=11 // pred_region
          _
        $region16: #{residual_actor_forward.1} parent=11 // pred_fallthru
          _
        // Predicated region
        $region17: #{residual_actor_forward.1} parent=11 // pred_check
          %p255 = pneg %p85
        $region18: #{residual_actor_forward.1} parent=11 // pred_check_branch
          %257 = sbr.rel (%p255) target = $region20
        $region19: #{residual_actor_forward.1} parent=11 // pred_region
          _
        $region20: #{residual_actor_forward.1} parent=11 // pred_fallthru
          _
        // Predicated region
        $region21: #{residual_actor_forward.1} parent=11 // pred_check
          %p258 = pneg %p106
        $region22: #{residual_actor_forward.1} parent=11 // pred_check_branch
          %260 = sbr.rel (%p258) target = $region24
        $region23: #{residual_actor_forward.1} parent=11 // pred_region
          %s262 = ssub.s32 4096, 4096
          %263 = vsyncadd [#allocation3], %s262
          %s264 = sshll.u32 [#allocation2], 4
          %s265 = int_to_ptr.vmem [resolvable:$true] %s264
          %270 = dma.hbm_to_vmem [thread:$0]  %s3, 4096, %s265, [#allocation3], 128, 128, 8
        $region24: #{residual_actor_forward.1} parent=11 // pred_fallthru
          _
        // Predicated region
        $region25: #{residual_actor_forward.1} parent=11 // pred_check
          %p271 = pneg %p127
        $region26: #{residual_actor_forward.1} parent=11 // pred_check_branch
          %273 = sbr.rel (%p271) target = $region28
        $region27: #{residual_actor_forward.1} parent=11 // pred_region
          _
        $region28: #{residual_actor_forward.1} parent=11 // pred_fallthru
          _
        // Predicated region
        $region29: #{residual_actor_forward.1} parent=11 // pred_check
          %p274 = pneg %p148
        $region30: #{residual_actor_forward.1} parent=11 // pred_check_branch
          %276 = sbr.rel (%p274) target = $region32
        $region31: #{residual_actor_forward.1} parent=11 // pred_region
          %s278 = ssub.s32 4096, 4096
          %279 = vsyncadd [#allocation5], %s278
          %s280 = sshll.u32 [#allocation4], 4
          %s281 = int_to_ptr.vmem [resolvable:$true] %s280
          %286 = dma.hbm_to_vmem [thread:$0]  %s5, 4096, %s281, [#allocation5], 128, 128, 8
        $region32: #{residual_actor_forward.1} parent=11 // pred_fallthru
          _
        // Predicated region
        $region33: #{residual_actor_forward.1} parent=11 // pred_check
          %p287 = pneg %p169
        $region34: #{residual_actor_forward.1} parent=11 // pred_check_branch
          %289 = sbr.rel (%p287) target = $region36
        $region35: #{residual_actor_forward.1} parent=11 // pred_region
          _
        $region36: #{residual_actor_forward.1} parent=11 // pred_fallthru
          _
        // Predicated region
        $region37: #{residual_actor_forward.1} parent=11 // pred_check
          %p290 = pneg %p190
        $region38: #{residual_actor_forward.1} parent=11 // pred_check_branch
          %292 = sbr.rel (%p290) target = $region40
        $region39: #{residual_actor_forward.1} parent=11 // pred_region
          _
        $region40: #{residual_actor_forward.1} parent=11 // pred_fallthru
          _
        // Predicated region
        $region41: #{residual_actor_forward.1} parent=11 // pred_check
          %p293 = pneg %p211
        $region42: #{residual_actor_forward.1} parent=11 // pred_check_branch
          %295 = sbr.rel (%p293) target = $region44
        $region43: #{residual_actor_forward.1} parent=11 // pred_region
          _
        $region44: #{residual_actor_forward.1} parent=11 // pred_fallthru
          _
      $region12: #{residual_actor_forward.1} parent=5 // pred_fallthru
        _
      %p296 = scmp.lt.s32.totalorder %s17, 3
      // Predicated region
      $region45: #{residual_actor_forward.1} parent=5 // pred_check
        %p297 = pneg %p296
      $region46: #{residual_actor_forward.1} parent=5 // pred_check_branch
        %299 = sbr.rel (%p297) target = $region48
      $region47: #{residual_actor_forward.1} parent=5 // pred_region
        // Predicated region
        $region49: #{residual_actor_forward.1} parent=47 // pred_check
          %p300 = pneg %p37
        $region50: #{residual_actor_forward.1} parent=47 // pred_check_branch
          %302 = sbr.rel (%p300) target = $region52
        $region51: #{residual_actor_forward.1} parent=47 // pred_region
          %s303 = smul.u32 2, %s17
          %p304 = scmp.lt.s32.totalorder %s303, 5
          %s305 = scalar_select %p304, %s303, 5
          %s306 = smul.addr %s305, 8
          %s307 = scalar_lea.vmem %s0, %s306
          %s308 = smul.u32 2, %s17
        $region52: #{residual_actor_forward.1} parent=47 // pred_fallthru
          _
      $region48: #{residual_actor_forward.1} parent=5 // pred_fallthru
        _
      %p309 = scmp.le.s32.totalorder 1, %s17
      %p310 = scmp.lt.s32.totalorder %s17, 4
      %p311 = pnand %p309, %p310
      %p312 = pneg %p311
      // Predicated region
      $region53: #{residual_actor_forward.1} parent=5 // pred_check
        _
      $region54: #{residual_actor_forward.1} parent=5 // pred_check_branch
        %314 = sbr.rel (%p311) target = $region56
      $region55: #{residual_actor_forward.1} parent=5 // pred_region
        %s315 = ssub.s32 %s17, 1
        // Predicated region
        $region57: #{residual_actor_forward.1} parent=55 // pred_check
          %p316 = pneg %p106
        $region58: #{residual_actor_forward.1} parent=55 // pred_check_branch
          %318 = sbr.rel (%p316) target = $region60
        $region59: #{residual_actor_forward.1} parent=55 // pred_region
          %319 = dma.done [#allocation3], 4096
        $region60: #{residual_actor_forward.1} parent=55 // pred_fallthru
          _
        // Predicated region
        $region61: #{residual_actor_forward.1} parent=55 // pred_check
          %p320 = pneg %p148
        $region62: #{residual_actor_forward.1} parent=55 // pred_check_branch
          %322 = sbr.rel (%p320) target = $region64
        $region63: #{residual_actor_forward.1} parent=55 // pred_region
          %323 = dma.done [#allocation5], 4096
        $region64: #{residual_actor_forward.1} parent=55 // pred_fallthru
          _
        %s324 = smul.u32 2, %s22
        %p325 = scmp.lt.s32.totalorder %s324, 5
        %s326 = scalar_select %p325, %s324, 5
        %s327 = smul.addr %s326, 8
        %s328 = scalar_lea.vmem %s0, %s327
        %p329 = pneg %p43
        %p330 = pneg %p40
        %p331 = pneg %p64
        %p332 = pneg %p61
        %p333 = pneg %p85
        %p334 = pneg %p82
        %p335 = pneg %p106
        %p336 = pneg %p103
        %p337 = pneg %p127
        %p338 = pneg %p124
        %p339 = pneg %p148
        %p340 = pneg %p145
        %p341 = pneg %p169
        %p342 = pneg %p166
        %p343 = pneg %p190
        %p344 = pneg %p187
        %p345 = pneg %p211
        %p346 = pneg %p208
        %p347 = pneg %p237
        %p348 = pneg %p234
        %s349 = smul.u32 2, %s22
        %p350 = scmp.lt.s32.totalorder %s349, 5
        %s351 = scalar_select %p350, %s349, 5
        %s352 = smul.addr %s351, 8
        %s353 = scalar_lea.vmem %s9, %s352
        %s354 = smul.u32 2, %s22
        %p355 = scmp.lt.s32.totalorder %s354, 5
        %s356 = scalar_select %p355, %s354, 5
        %s357 = smul.addr %s356, 8
        %s358 = scalar_lea.vmem %s0, %s357
        %s359 = smul.u32 2, %s22
        %s360 = smul.u32 2, %s22
        %p361 = scmp.lt.s32.totalorder %s360, 5
        %s362 = scalar_select %p361, %s360, 5
        %s363 = smul.addr %s362, 8
        %s364 = scalar_lea.vmem %s9, %s363
        %s365 = smul.u32 2, %s22
        %v367 = vld [vmem:[%s358] sm:$0xff]
        %v368 = vld [vmem:[%s358 + $0x8] sm:$0xff]
        %v369 = vld [vmem:[%s1] ss:$8 sm:$0x3]
        %371 = vset.pattern.permute.xlu0 0
        %372 = vperm.xlu0 %371, %v367
        %v373 = vpop.permute.xlu0 %372
        %376 = vset.pattern.permute.xlu0 0
        %377 = vperm.xlu0 %376, %v368
        %v378 = vpop.permute.xlu0 %377
        %v381 = vlaneseq
        %v382 = vshrl.u32 %v381, 7
        %v383 = vsub.s32 0, %v382
        %v384 = vrot.slane %v369, %v383
        %v385 = vlaneseq
        %v386 = vshrl.u32 %v385, 7
        %v387 = vsub.s32 1, %v386
        %v388 = vrot.slane %v369, %v387
        %v391 = vmul.f32 %v373, %v384
        %v392 = vmul.f32 %v373, %v388
        %v393 = vmul.f32 %v378, %v384
        %v394 = vmul.f32 %v378, %v388
        %s395 = scalar_lea.vmem %s1, 1
        %v396 = vld [vmem:[%s395] ss:$8 sm:$0x3]
        %397 = vset.pattern.permute.xlu0 1
        %398 = vperm.xlu0 %397, %v367
        %v399 = vpop.permute.xlu0 %398
        %401 = vset.pattern.permute.xlu0 1
        %402 = vperm.xlu0 %401, %v368
        %v403 = vpop.permute.xlu0 %402
        %v406 = vlaneseq
        %v407 = vshrl.u32 %v406, 7
        %v408 = vsub.s32 0, %v407
        %v409 = vrot.slane %v396, %v408
        %v410 = vlaneseq
        %v411 = vshrl.u32 %v410, 7
        %v412 = vsub.s32 1, %v411
        %v413 = vrot.slane %v396, %v412
        %v416 = vmul.f32 %v399, %v409
        %v417 = vmul.f32 %v399, %v413
        %v418 = vmul.f32 %v403, %v409
        %v419 = vmul.f32 %v403, %v413
        %v420 = vadd.f32 %v391, %v416
        %v421 = vadd.f32 %v392, %v417
        %v422 = vadd.f32 %v393, %v418
        %v423 = vadd.f32 %v394, %v419
        %v424 = vld [vmem:[%s2] sm:$0x3]
        %v426 = vlaneseq
        %v427 = vshrl.u32 %v426, 7
        %v428 = vsub.s32 0, %v427
        %v429 = vrot.slane %v424, %v428
        %v430 = vlaneseq
        %v431 = vshrl.u32 %v430, 7
        %v432 = vsub.s32 1, %v431
        %v433 = vrot.slane %v424, %v432
        %v436 = vadd.f32 %v420, %v429
        %v437 = vadd.f32 %v421, %v433
        %v438 = vadd.f32 %v422, %v429
        %v439 = vadd.f32 %v423, %v433
        %v440 = vmax.f32 %v436, 0.0
        %v441 = vmax.f32 %v437, 0.0
        %v442 = vmax.f32 %v438, 0.0
        %v443 = vmax.f32 %v439, 0.0
        %v444 = vpack.c.bf16 %v442, %v440
        %v445 = vpack.c.bf16 %v443, %v441
        %v446 = vld [vmem:[#allocation2] sm:$0xff]
        %v447 = vld [vmem:[#allocation2 + $0x8] sm:$0xff]
        %v448 = vld [vmem:[#allocation2 + $0x10] sm:$0xff]
        %v449 = vld [vmem:[#allocation2 + $0x18] sm:$0xff]
        %v450 = vld [vmem:[#allocation2 + $0x20] sm:$0xff]
        %v451 = vld [vmem:[#allocation2 + $0x28] sm:$0xff]
        %v452 = vld [vmem:[#allocation2 + $0x30] sm:$0xff]
        %v453 = vld [vmem:[#allocation2 + $0x38] sm:$0xff]
        %v454 = vld [vmem:[#allocation2 + $0x40] sm:$0xff]
        %v455 = vld [vmem:[#allocation2 + $0x48] sm:$0xff]
        %v456 = vld [vmem:[#allocation2 + $0x50] sm:$0xff]
        %v457 = vld [vmem:[#allocation2 + $0x58] sm:$0xff]
        %v458 = vld [vmem:[#allocation2 + $0x60] sm:$0xff]
        %v459 = vld [vmem:[#allocation2 + $0x68] sm:$0xff]
        %v460 = vld [vmem:[#allocation2 + $0x70] sm:$0xff]
        %v461 = vld [vmem:[#allocation2 + $0x78] sm:$0xff]
        %v462 = vld [vmem:[#allocation2 + $0x80] sm:$0xff]
        %v463 = vld [vmem:[#allocation2 + $0x88] sm:$0xff]
        %v464 = vld [vmem:[#allocation2 + $0x90] sm:$0xff]
        %v465 = vld [vmem:[#allocation2 + $0x98] sm:$0xff]
        %v466 = vld [vmem:[#allocation2 + $0xa0] sm:$0xff]
        %v467 = vld [vmem:[#allocation2 + $0xa8] sm:$0xff]
        %v468 = vld [vmem:[#allocation2 + $0xb0] sm:$0xff]
        %v469 = vld [vmem:[#allocation2 + $0xb8] sm:$0xff]
        %v470 = vld [vmem:[#allocation2 + $0xc0] sm:$0xff]
        %v471 = vld [vmem:[#allocation2 + $0xc8] sm:$0xff]
        %v472 = vld [vmem:[#allocation2 + $0xd0] sm:$0xff]
        %v473 = vld [vmem:[#allocation2 + $0xd8] sm:$0xff]
        %v474 = vld [vmem:[#allocation2 + $0xe0] sm:$0xff]
        %v475 = vld [vmem:[#allocation2 + $0xe8] sm:$0xff]
        %v476 = vld [vmem:[#allocation2 + $0xf0] sm:$0xff]
        %v477 = vld [vmem:[#allocation2 + $0xf8] sm:$0xff]
        %v478 = vld [vmem:[%s4] sm:$0x3]
        %v480 = vlaneseq
        %v481 = vshrl.u32 %v480, 7
        %v482 = vsub.s32 0, %v481
        %v483 = vrot.slane %v478, %v482
        %v484 = vlaneseq
        %v485 = vshrl.u32 %v484, 7
        %v486 = vsub.s32 1, %v485
        %v487 = vrot.slane %v478, %v486
        %v522 = vunpack.c.l.b16 %v446
        %v523 = vunpack.c.h.b16 %v446
        %v524 = vunpack.c.l.b16 %v447
        %v525 = vunpack.c.h.b16 %v447
        %v526 = vunpack.c.l.b16 %v448
        %v527 = vunpack.c.h.b16 %v448
        %v528 = vunpack.c.l.b16 %v449
        %v529 = vunpack.c.h.b16 %v449
        %v530 = vunpack.c.l.b16 %v450
        %v531 = vunpack.c.h.b16 %v450
        %v532 = vunpack.c.l.b16 %v451
        %v533 = vunpack.c.h.b16 %v451
        %v534 = vunpack.c.l.b16 %v452
        %v535 = vunpack.c.h.b16 %v452
        %v536 = vunpack.c.l.b16 %v453
        %v537 = vunpack.c.h.b16 %v453
        %v538 = vunpack.c.l.b16 %v454
        %v539 = vunpack.c.h.b16 %v454
        %v540 = vunpack.c.l.b16 %v455
        %v541 = vunpack.c.h.b16 %v455
        %v542 = vunpack.c.l.b16 %v456
        %v543 = vunpack.c.h.b16 %v456
        %v544 = vunpack.c.l.b16 %v457
        %v545 = vunpack.c.h.b16 %v457
        %v546 = vunpack.c.l.b16 %v458
        %v547 = vunpack.c.h.b16 %v458
        %v548 = vunpack.c.l.b16 %v459
        %v549 = vunpack.c.h.b16 %v459
        %v550 = vunpack.c.l.b16 %v460
        %v551 = vunpack.c.h.b16 %v460
        %v552 = vunpack.c.l.b16 %v461
        %v553 = vunpack.c.h.b16 %v461
        %v554 = vunpack.c.l.b16 %v462
        %v555 = vunpack.c.h.b16 %v462
        %v556 = vunpack.c.l.b16 %v463
        %v557 = vunpack.c.h.b16 %v463
        %v558 = vunpack.c.l.b16 %v464
        %v559 = vunpack.c.h.b16 %v464
        %v560 = vunpack.c.l.b16 %v465
        %v561 = vunpack.c.h.b16 %v465
        %v562 = vunpack.c.l.b16 %v466
        %v563 = vunpack.c.h.b16 %v466
        %v564 = vunpack.c.l.b16 %v467
        %v565 = vunpack.c.h.b16 %v467
        %v566 = vunpack.c.l.b16 %v468
        %v567 = vunpack.c.h.b16 %v468
        %v568 = vunpack.c.l.b16 %v469
        %v569 = vunpack.c.h.b16 %v469
        %v570 = vunpack.c.l.b16 %v470
        %v571 = vunpack.c.h.b16 %v470
        %v572 = vunpack.c.l.b16 %v471
        %v573 = vunpack.c.h.b16 %v471
        %v574 = vunpack.c.l.b16 %v472
        %v575 = vunpack.c.h.b16 %v472
        %v576 = vunpack.c.l.b16 %v473
        %v577 = vunpack.c.h.b16 %v473
        %v578 = vunpack.c.l.b16 %v474
        %v579 = vunpack.c.h.b16 %v474
        %v580 = vunpack.c.l.b16 %v475
        %v581 = vunpack.c.h.b16 %v475
        %v582 = vunpack.c.l.b16 %v476
        %v583 = vunpack.c.h.b16 %v476
        %v584 = vunpack.c.l.b16 %v477
        %v585 = vunpack.c.h.b16 %v477
        %v586 = vpack.c.b16 %v524, %v522
        %v587 = vpack.c.b16 %v525, %v523
        %v588 = vpack.c.b16 %v528, %v526
        %v589 = vpack.c.b16 %v529, %v527
        %v590 = vpack.c.b16 %v532, %v530
        %v591 = vpack.c.b16 %v533, %v531
        %v592 = vpack.c.b16 %v536, %v534
        %v593 = vpack.c.b16 %v537, %v535
        %v594 = vpack.c.b16 %v540, %v538
        %v595 = vpack.c.b16 %v541, %v539
        %v596 = vpack.c.b16 %v544, %v542
        %v597 = vpack.c.b16 %v545, %v543
        %v598 = vpack.c.b16 %v548, %v546
        %v599 = vpack.c.b16 %v549, %v547
        %v600 = vpack.c.b16 %v552, %v550
        %v601 = vpack.c.b16 %v553, %v551
        %v602 = vpack.c.b16 %v556, %v554
        %v603 = vpack.c.b16 %v557, %v555
        %v604 = vpack.c.b16 %v560, %v558
        %v605 = vpack.c.b16 %v561, %v559
        %v606 = vpack.c.b16 %v564, %v562
        %v607 = vpack.c.b16 %v565, %v563
        %v608 = vpack.c.b16 %v568, %v566
        %v609 = vpack.c.b16 %v569, %v567
        %v610 = vpack.c.b16 %v572, %v570
        %v611 = vpack.c.b16 %v573, %v571
        %v612 = vpack.c.b16 %v576, %v574
        %v613 = vpack.c.b16 %v577, %v575
        %v614 = vpack.c.b16 %v580, %v578
        %v615 = vpack.c.b16 %v581, %v579
        %v616 = vpack.c.b16 %v584, %v582
        %v617 = vpack.c.b16 %v585, %v583
        %650 = vmatprep.subr.bf16.mxu0 %v587
        %651 = vmatpush1.bf16.msra.mxu0 %v586
        %652 = vmatprep.subr.bf16.mxu0 %v589
        %653 = vmatpush1.bf16.msra.mxu0 %v588
        %654 = vmatprep.subr.bf16.mxu0 %v591
        %655 = vmatpush1.bf16.msra.mxu0 %v590
        %656 = vmatprep.subr.bf16.mxu0 %v593
        %657 = vmatpush1.bf16.msra.mxu0 %v592
        %658 = vmatprep.subr.bf16.mxu0 %v595
        %659 = vmatpush1.bf16.msra.mxu0 %v594
        %660 = vmatprep.subr.bf16.mxu0 %v597
        %661 = vmatpush1.bf16.msra.mxu0 %v596
        %662 = vmatprep.subr.bf16.mxu0 %v599
        %663 = vmatpush1.bf16.msra.mxu0 %v598
        %664 = vmatprep.subr.bf16.mxu0 %v601
        %665 = vmatpush1.bf16.msra.mxu0 %v600
        %666 = vmatprep.subr.bf16.mxu0 %v603
        %667 = vmatpush1.bf16.msra.mxu0 %v602
        %668 = vmatprep.subr.bf16.mxu0 %v605
        %669 = vmatpush1.bf16.msra.mxu0 %v604
        %670 = vmatprep.subr.bf16.mxu0 %v607
        %671 = vmatpush1.bf16.msra.mxu0 %v606
        %672 = vmatprep.subr.bf16.mxu0 %v609
        %673 = vmatpush1.bf16.msra.mxu0 %v608
        %674 = vmatprep.subr.bf16.mxu0 %v611
        %675 = vmatpush1.bf16.msra.mxu0 %v610
        %676 = vmatprep.subr.bf16.mxu0 %v613
        %677 = vmatpush1.bf16.msra.mxu0 %v612
        %678 = vmatprep.subr.bf16.mxu0 %v615
        %679 = vmatpush1.bf16.msra.mxu0 %v614
        %680 = vmatprep.subr.bf16.mxu0 %v617
        %681 = vmatpush1.bf16.msra.mxu0 %v616
        %682 = vmatprep.mubr.bf16.mxu0 %v445
        %683 = vmatmul.mubr.bf16.gmra.mrb[0].mxu0 %v444
        %v684 = vpop.f32.mrb[0].mxu0
        %v685 = vadd.f32 %v483, %v684
        %v686 = vpop.f32.mrb[0].mxu0
        %v687 = vadd.f32 %v487, %v686
        %v688 = vpop.f32.mrb[0].mxu0
        %v689 = vadd.f32 %v483, %v688
        %v690 = vpop.f32.mrb[0].mxu0
        %v691 = vadd.f32 %v487, %v690
        %692 = vdwg.mxu0
        %v693 = vmax.f32 %v685, 0.0
        %v694 = vmax.f32 %v687, 0.0
        %v695 = vmax.f32 %v689, 0.0
        %v696 = vmax.f32 %v691, 0.0
        %v697 = vpack.c.bf16 %v695, %v693
        %v698 = vpack.c.bf16 %v696, %v694
        %v699 = vld [vmem:[#allocation4] sm:$0xff]
        %v700 = vld [vmem:[#allocation4 + $0x8] sm:$0xff]
        %v701 = vld [vmem:[#allocation4 + $0x10] sm:$0xff]
        %v702 = vld [vmem:[#allocation4 + $0x18] sm:$0xff]
        %v703 = vld [vmem:[#allocation4 + $0x20] sm:$0xff]
        %v704 = vld [vmem:[#allocation4 + $0x28] sm:$0xff]
        %v705 = vld [vmem:[#allocation4 + $0x30] sm:$0xff]
        %v706 = vld [vmem:[#allocation4 + $0x38] sm:$0xff]
        %v707 = vld [vmem:[#allocation4 + $0x40] sm:$0xff]
        %v708 = vld [vmem:[#allocation4 + $0x48] sm:$0xff]
        %v709 = vld [vmem:[#allocation4 + $0x50] sm:$0xff]
        %v710 = vld [vmem:[#allocation4 + $0x58] sm:$0xff]
        %v711 = vld [vmem:[#allocation4 + $0x60] sm:$0xff]
        %v712 = vld [vmem:[#allocation4 + $0x68] sm:$0xff]
        %v713 = vld [vmem:[#allocation4 + $0x70] sm:$0xff]
        %v714 = vld [vmem:[#allocation4 + $0x78] sm:$0xff]
        %v715 = vld [vmem:[#allocation4 + $0x80] sm:$0xff]
        %v716 = vld [vmem:[#allocation4 + $0x88] sm:$0xff]
        %v717 = vld [vmem:[#allocation4 + $0x90] sm:$0xff]
        %v718 = vld [vmem:[#allocation4 + $0x98] sm:$0xff]
        %v719 = vld [vmem:[#allocation4 + $0xa0] sm:$0xff]
        %v720 = vld [vmem:[#allocation4 + $0xa8] sm:$0xff]
        %v721 = vld [vmem:[#allocation4 + $0xb0] sm:$0xff]
        %v722 = vld [vmem:[#allocation4 + $0xb8] sm:$0xff]
        %v723 = vld [vmem:[#allocation4 + $0xc0] sm:$0xff]
        %v724 = vld [vmem:[#allocation4 + $0xc8] sm:$0xff]
        %v725 = vld [vmem:[#allocation4 + $0xd0] sm:$0xff]
        %v726 = vld [vmem:[#allocation4 + $0xd8] sm:$0xff]
        %v727 = vld [vmem:[#allocation4 + $0xe0] sm:$0xff]
        %v728 = vld [vmem:[#allocation4 + $0xe8] sm:$0xff]
        %v729 = vld [vmem:[#allocation4 + $0xf0] sm:$0xff]
        %v730 = vld [vmem:[#allocation4 + $0xf8] sm:$0xff]
        %v731 = vld [vmem:[%s6] sm:$0x3]
        %v733 = vlaneseq
        %v734 = vshrl.u32 %v733, 7
        %v735 = vsub.s32 0, %v734
        %v736 = vrot.slane %v731, %v735
        %v737 = vlaneseq
        %v738 = vshrl.u32 %v737, 7
        %v739 = vsub.s32 1, %v738
        %v740 = vrot.slane %v731, %v739
        %v775 = vunpack.c.l.b16 %v699
        %v776 = vunpack.c.h.b16 %v699
        %v777 = vunpack.c.l.b16 %v700
        %v778 = vunpack.c.h.b16 %v700
        %v779 = vunpack.c.l.b16 %v701
        %v780 = vunpack.c.h.b16 %v701
        %v781 = vunpack.c.l.b16 %v702
        %v782 = vunpack.c.h.b16 %v702
        %v783 = vunpack.c.l.b16 %v703
        %v784 = vunpack.c.h.b16 %v703
        %v785 = vunpack.c.l.b16 %v704
        %v786 = vunpack.c.h.b16 %v704
        %v787 = vunpack.c.l.b16 %v705
        %v788 = vunpack.c.h.b16 %v705
        %v789 = vunpack.c.l.b16 %v706
        %v790 = vunpack.c.h.b16 %v706
        %v791 = vunpack.c.l.b16 %v707
        %v792 = vunpack.c.h.b16 %v707
        %v793 = vunpack.c.l.b16 %v708
        %v794 = vunpack.c.h.b16 %v708
        %v795 = vunpack.c.l.b16 %v709
        %v796 = vunpack.c.h.b16 %v709
        %v797 = vunpack.c.l.b16 %v710
        %v798 = vunpack.c.h.b16 %v710
        %v799 = vunpack.c.l.b16 %v711
        %v800 = vunpack.c.h.b16 %v711
        %v801 = vunpack.c.l.b16 %v712
        %v802 = vunpack.c.h.b16 %v712
        %v803 = vunpack.c.l.b16 %v713
        %v804 = vunpack.c.h.b16 %v713
        %v805 = vunpack.c.l.b16 %v714
        %v806 = vunpack.c.h.b16 %v714
        %v807 = vunpack.c.l.b16 %v715
        %v808 = vunpack.c.h.b16 %v715
        %v809 = vunpack.c.l.b16 %v716
        %v810 = vunpack.c.h.b16 %v716
        %v811 = vunpack.c.l.b16 %v717
        %v812 = vunpack.c.h.b16 %v717
        %v813 = vunpack.c.l.b16 %v718
        %v814 = vunpack.c.h.b16 %v718
        %v815 = vunpack.c.l.b16 %v719
        %v816 = vunpack.c.h.b16 %v719
        %v817 = vunpack.c.l.b16 %v720
        %v818 = vunpack.c.h.b16 %v720
        %v819 = vunpack.c.l.b16 %v721
        %v820 = vunpack.c.h.b16 %v721
        %v821 = vunpack.c.l.b16 %v722
        %v822 = vunpack.c.h.b16 %v722
        %v823 = vunpack.c.l.b16 %v723
        %v824 = vunpack.c.h.b16 %v723
        %v825 = vunpack.c.l.b16 %v724
        %v826 = vunpack.c.h.b16 %v724
        %v827 = vunpack.c.l.b16 %v725
        %v828 = vunpack.c.h.b16 %v725
        %v829 = vunpack.c.l.b16 %v726
        %v830 = vunpack.c.h.b16 %v726
        %v831 = vunpack.c.l.b16 %v727
        %v832 = vunpack.c.h.b16 %v727
        %v833 = vunpack.c.l.b16 %v728
        %v834 = vunpack.c.h.b16 %v728
        %v835 = vunpack.c.l.b16 %v729
        %v836 = vunpack.c.h.b16 %v729
        %v837 = vunpack.c.l.b16 %v730
        %v838 = vunpack.c.h.b16 %v730
        %v839 = vpack.c.b16 %v777, %v775
        %v840 = vpack.c.b16 %v778, %v776
        %v841 = vpack.c.b16 %v781, %v779
        %v842 = vpack.c.b16 %v782, %v780
        %v843 = vpack.c.b16 %v785, %v783
        %v844 = vpack.c.b16 %v786, %v784
        %v845 = vpack.c.b16 %v789, %v787
        %v846 = vpack.c.b16 %v790, %v788
        %v847 = vpack.c.b16 %v793, %v791
        %v848 = vpack.c.b16 %v794, %v792
        %v849 = vpack.c.b16 %v797, %v795
        %v850 = vpack.c.b16 %v798, %v796
        %v851 = vpack.c.b16 %v801, %v799
        %v852 = vpack.c.b16 %v802, %v800
        %v853 = vpack.c.b16 %v805, %v803
        %v854 = vpack.c.b16 %v806, %v804
        %v855 = vpack.c.b16 %v809, %v807
        %v856 = vpack.c.b16 %v810, %v808
        %v857 = vpack.c.b16 %v813, %v811
        %v858 = vpack.c.b16 %v814, %v812
        %v859 = vpack.c.b16 %v817, %v815
        %v860 = vpack.c.b16 %v818, %v816
        %v861 = vpack.c.b16 %v821, %v819
        %v862 = vpack.c.b16 %v822, %v820
        %v863 = vpack.c.b16 %v825, %v823
        %v864 = vpack.c.b16 %v826, %v824
        %v865 = vpack.c.b16 %v829, %v827
        %v866 = vpack.c.b16 %v830, %v828
        %v867 = vpack.c.b16 %v833, %v831
        %v868 = vpack.c.b16 %v834, %v832
        %v869 = vpack.c.b16 %v837, %v835
        %v870 = vpack.c.b16 %v838, %v836
        %903 = vmatprep.subr.bf16.mxu0 %v840
        %904 = vmatpush1.bf16.msra.mxu0 %v839
        %905 = vmatprep.subr.bf16.mxu0 %v842
        %906 = vmatpush1.bf16.msra.mxu0 %v841
        %907 = vmatprep.subr.bf16.mxu0 %v844
        %908 = vmatpush1.bf16.msra.mxu0 %v843
        %909 = vmatprep.subr.bf16.mxu0 %v846
        %910 = vmatpush1.bf16.msra.mxu0 %v845
        %911 = vmatprep.subr.bf16.mxu0 %v848
        %912 = vmatpush1.bf16.msra.mxu0 %v847
        %913 = vmatprep.subr.bf16.mxu0 %v850
        %914 = vmatpush1.bf16.msra.mxu0 %v849
        %915 = vmatprep.subr.bf16.mxu0 %v852
        %916 = vmatpush1.bf16.msra.mxu0 %v851
        %917 = vmatprep.subr.bf16.mxu0 %v854
        %918 = vmatpush1.bf16.msra.mxu0 %v853
        %919 = vmatprep.subr.bf16.mxu0 %v856
        %920 = vmatpush1.bf16.msra.mxu0 %v855
        %921 = vmatprep.subr.bf16.mxu0 %v858
        %922 = vmatpush1.bf16.msra.mxu0 %v857
        %923 = vmatprep.subr.bf16.mxu0 %v860
        %924 = vmatpush1.bf16.msra.mxu0 %v859
        %925 = vmatprep.subr.bf16.mxu0 %v862
        %926 = vmatpush1.bf16.msra.mxu0 %v861
        %927 = vmatprep.subr.bf16.mxu0 %v864
        %928 = vmatpush1.bf16.msra.mxu0 %v863
        %929 = vmatprep.subr.bf16.mxu0 %v866
        %930 = vmatpush1.bf16.msra.mxu0 %v865
        %931 = vmatprep.subr.bf16.mxu0 %v868
        %932 = vmatpush1.bf16.msra.mxu0 %v867
        %933 = vmatprep.subr.bf16.mxu0 %v870
        %934 = vmatpush1.bf16.msra.mxu0 %v869
        %935 = vmatprep.mubr.bf16.mxu0 %v698
        %936 = vmatmul.mubr.bf16.gmra.mrb[0].mxu0 %v697
        %v937 = vpop.f32.mrb[0].mxu0
        %v938 = vadd.f32 %v736, %v937
        %v939 = vpop.f32.mrb[0].mxu0
        %v940 = vadd.f32 %v740, %v939
        %v941 = vpop.f32.mrb[0].mxu0
        %v942 = vadd.f32 %v736, %v941
        %v943 = vpop.f32.mrb[0].mxu0
        %v944 = vadd.f32 %v740, %v943
        %945 = vdwg.mxu0
        %v946 = vmax.f32 %v938, 0.0
        %v947 = vmax.f32 %v940, 0.0
        %v948 = vmax.f32 %v942, 0.0
        %v949 = vmax.f32 %v944, 0.0
        %v950 = vpack.c.bf16 %v948, %v946
        %v951 = vpack.c.bf16 %v949, %v947
        %v952 = vld [vmem:[%s7] sm:$0xf]
        %v953 = vld [vmem:[%s7 + $0x4] sm:$0xf]
        %v954 = vld [vmem:[%s7 + $0x8] sm:$0xf]
        %v955 = vld [vmem:[%s7 + $0xc] sm:$0xf]
        %v956 = vld [vmem:[%s7 + $0x10] sm:$0xf]
        %v957 = vld [vmem:[%s7 + $0x14] sm:$0xf]
        %v958 = vld [vmem:[%s7 + $0x18] sm:$0xf]
        %v959 = vld [vmem:[%s7 + $0x1c] sm:$0xf]
        %v960 = vld [vmem:[%s7 + $0x20] sm:$0xf]
        %v961 = vld [vmem:[%s7 + $0x24] sm:$0xf]
        %v962 = vld [vmem:[%s7 + $0x28] sm:$0xf]
        %v963 = vld [vmem:[%s7 + $0x2c] sm:$0xf]
        %v964 = vld [vmem:[%s7 + $0x30] sm:$0xf]
        %v965 = vld [vmem:[%s7 + $0x34] sm:$0xf]
        %v966 = vld [vmem:[%s7 + $0x38] sm:$0xf]
        %v967 = vld [vmem:[%s7 + $0x3c] sm:$0xf]
        %v968 = vld [vmem:[%s7 + $0x40] sm:$0xf]
        %v969 = vld [vmem:[%s7 + $0x44] sm:$0xf]
        %v970 = vld [vmem:[%s7 + $0x48] sm:$0xf]
        %v971 = vld [vmem:[%s7 + $0x4c] sm:$0xf]
        %v972 = vld [vmem:[%s7 + $0x50] sm:$0xf]
        %v973 = vld [vmem:[%s7 + $0x54] sm:$0xf]
        %v974 = vld [vmem:[%s7 + $0x58] sm:$0xf]
        %v975 = vld [vmem:[%s7 + $0x5c] sm:$0xf]
        %v976 = vld [vmem:[%s7 + $0x60] sm:$0xf]
        %v977 = vld [vmem:[%s7 + $0x64] sm:$0xf]
        %v978 = vld [vmem:[%s7 + $0x68] sm:$0xf]
        %v979 = vld [vmem:[%s7 + $0x6c] sm:$0xf]
        %v980 = vld [vmem:[%s7 + $0x70] sm:$0xf]
        %v981 = vld [vmem:[%s7 + $0x74] sm:$0xf]
        %v982 = vld [vmem:[%s7 + $0x78] sm:$0xf]
        %v983 = vld [vmem:[%s7 + $0x7c] sm:$0xf]
        %v984 = vld [vmem:[%s8] sm:$0x1]
        %v986 = vlaneseq
        %v987 = vshrl.u32 %v986, 7
        %v988 = vsub.s32 0, %v987
        %v989 = vrot.slane %v984, %v988
        %v1023 = vunpack.c.l.b16 %v952
        %v1024 = vunpack.c.l.b16 %v953
        %v1025 = vunpack.c.l.b16 %v954
        %v1026 = vunpack.c.l.b16 %v955
        %v1027 = vunpack.c.l.b16 %v956
        %v1028 = vunpack.c.l.b16 %v957
        %v1029 = vunpack.c.l.b16 %v958
        %v1030 = vunpack.c.l.b16 %v959
        %v1031 = vunpack.c.l.b16 %v960
        %v1032 = vunpack.c.l.b16 %v961
        %v1033 = vunpack.c.l.b16 %v962
        %v1034 = vunpack.c.l.b16 %v963
        %v1035 = vunpack.c.l.b16 %v964
        %v1036 = vunpack.c.l.b16 %v965
        %v1037 = vunpack.c.l.b16 %v966
        %v1038 = vunpack.c.l.b16 %v967
        %v1039 = vunpack.c.l.b16 %v968
        %v1040 = vunpack.c.l.b16 %v969
        %v1041 = vunpack.c.l.b16 %v970
        %v1042 = vunpack.c.l.b16 %v971
        %v1043 = vunpack.c.l.b16 %v972
        %v1044 = vunpack.c.l.b16 %v973
        %v1045 = vunpack.c.l.b16 %v974
        %v1046 = vunpack.c.l.b16 %v975
        %v1047 = vunpack.c.l.b16 %v976
        %v1048 = vunpack.c.l.b16 %v977
        %v1049 = vunpack.c.l.b16 %v978
        %v1050 = vunpack.c.l.b16 %v979
        %v1051 = vunpack.c.l.b16 %v980
        %v1052 = vunpack.c.l.b16 %v981
        %v1053 = vunpack.c.l.b16 %v982
        %v1054 = vunpack.c.l.b16 %v983
        %v1055 = vpack.c.b16 %v1024, %v1023
        %v1056 = vpack.c.b16 %v1026, %v1025
        %v1057 = vpack.c.b16 %v1028, %v1027
        %v1058 = vpack.c.b16 %v1030, %v1029
        %v1059 = vpack.c.b16 %v1032, %v1031
        %v1060 = vpack.c.b16 %v1034, %v1033
        %v1061 = vpack.c.b16 %v1036, %v1035
        %v1062 = vpack.c.b16 %v1038, %v1037
        %v1063 = vpack.c.b16 %v1040, %v1039
        %v1064 = vpack.c.b16 %v1042, %v1041
        %v1065 = vpack.c.b16 %v1044, %v1043
        %v1066 = vpack.c.b16 %v1046, %v1045
        %v1067 = vpack.c.b16 %v1048, %v1047
        %v1068 = vpack.c.b16 %v1050, %v1049
        %v1069 = vpack.c.b16 %v1052, %v1051
        %v1070 = vpack.c.b16 %v1054, %v1053
        %1087 = vmatprep.subr.bf16.mxu0 0
        %1088 = vmatpush1.bf16.msra.mxu0 %v1055
        %1089 = vmatprep.subr.bf16.mxu0 0
        %1090 = vmatpush1.bf16.msra.mxu0 %v1056
        %1091 = vmatprep.subr.bf16.mxu0 0
        %1092 = vmatpush1.bf16.msra.mxu0 %v1057
        %1093 = vmatprep.subr.bf16.mxu0 0
        %1094 = vmatpush1.bf16.msra.mxu0 %v1058
        %1095 = vmatprep.subr.bf16.mxu0 0
        %1096 = vmatpush1.bf16.msra.mxu0 %v1059
        %1097 = vmatprep.subr.bf16.mxu0 0
        %1098 = vmatpush1.bf16.msra.mxu0 %v1060
        %1099 = vmatprep.subr.bf16.mxu0 0
        %1100 = vmatpush1.bf16.msra.mxu0 %v1061
        %1101 = vmatprep.subr.bf16.mxu0 0
        %1102 = vmatpush1.bf16.msra.mxu0 %v1062
        %1103 = vmatprep.subr.bf16.mxu0 0
        %1104 = vmatpush1.bf16.msra.mxu0 %v1063
        %1105 = vmatprep.subr.bf16.mxu0 0
        %1106 = vmatpush1.bf16.msra.mxu0 %v1064
        %1107 = vmatprep.subr.bf16.mxu0 0
        %1108 = vmatpush1.bf16.msra.mxu0 %v1065
        %1109 = vmatprep.subr.bf16.mxu0 0
        %1110 = vmatpush1.bf16.msra.mxu0 %v1066
        %1111 = vmatprep.subr.bf16.mxu0 0
        %1112 = vmatpush1.bf16.msra.mxu0 %v1067
        %1113 = vmatprep.subr.bf16.mxu0 0
        %1114 = vmatpush1.bf16.msra.mxu0 %v1068
        %1115 = vmatprep.subr.bf16.mxu0 0
        %1116 = vmatpush1.bf16.msra.mxu0 %v1069
        %1117 = vmatprep.subr.bf16.mxu0 0
        %1118 = vmatpush1.bf16.msra.mxu0 %v1070
        %1119 = vmatprep.mubr.bf16.mxu0 %v951
        %1120 = vmatmul.mubr.bf16.gmra.mrb[0].mxu0 %v950
        %v1121 = vpop.f32.mrb[0].mxu0
        %v1122 = vadd.f32 %v989, %v1121
        %v1123 = vpop.f32.mrb[0].mxu0
        %v1124 = vpop.f32.mrb[0].mxu0
        %v1125 = vadd.f32 %v989, %v1124
        %v1126 = vpop.f32.mrb[0].mxu0
        %1127 = vdwg.mxu0
        %1128 = vst [vmem:[%s364] sm:$0xff] %v1122
        %1129 = vst [vmem:[%s364 + $0x8] sm:$0xff] %v1125
        %s1130 = smul.u32 2, %s22
        %p1131 = scmp.lt.s32.totalorder %s1130, 5
        %s1132 = scalar_select %p1131, %s1130, 5
        %s1133 = smul.addr %s1132, 8
        %s1134 = scalar_lea.vmem %s9, %s1133
        // Predicated region
        $region65: #{residual_actor_forward.1} parent=55 // pred_check
          %p1135 = pneg %p234
        $region66: #{residual_actor_forward.1} parent=55 // pred_check_branch
          %1137 = sbr.rel (%p1135) target = $region68
        $region67: #{residual_actor_forward.1} parent=55 // pred_region
          %s1138 = smul.u32 2, %s22
        $region68: #{residual_actor_forward.1} parent=55 // pred_fallthru
          _
      $region56: #{residual_actor_forward.1} parent=5 // pred_fallthru
        _
      %p1139 = scmp.le.s32.totalorder 2, %s17
      // Predicated region
      $region69: #{residual_actor_forward.1} parent=5 // pred_check
        %p1140 = pneg %p1139
      $region70: #{residual_actor_forward.1} parent=5 // pred_check_branch
        %1142 = sbr.rel (%p1140) target = $region72
      $region71: #{residual_actor_forward.1} parent=5 // pred_region
        %s1143 = ssub.s32 %s17, 2
        // Predicated region
        $region73: #{residual_actor_forward.1} parent=71 // pred_check
          %p1144 = pneg %p240
        $region74: #{residual_actor_forward.1} parent=71 // pred_check_branch
          %1146 = sbr.rel (%p1144) target = $region76
        $region75: #{residual_actor_forward.1} parent=71 // pred_region
          %s1147 = smul.u32 2, %s23
          %p1148 = scmp.lt.s32.totalorder %s1147, 5
          %s1149 = scalar_select %p1148, %s1147, 5
          %s1150 = smul.addr %s1149, 8
          %s1151 = scalar_lea.vmem %s9, %s1150
        $region76: #{residual_actor_forward.1} parent=71 // pred_fallthru
          _
      $region72: #{residual_actor_forward.1} parent=5 // pred_fallthru
        _
    $region6: #{residual_actor_forward.1} parent=1 // loop_footer
      %s21 = sadd.s32 1, %s17
    $region7: #{residual_actor_forward.1} parent=1 // loop_footer_branch
      %16 = sbr.rel target = $region3
    $region8: #{residual_actor_forward.1} parent=1 // loop_exit
      _
    %1152 = vsyncpa [#allocation3], 1
    %s1153 = scalar_lea.sflag [#allocation3], 1
    %1154 = vsyncpa %s1153, 1
    %1155 = vsyncpa [#allocation5], 1

</llo_original>
